<compile_context>
chip_gen: v6e
topology: v6e:2x2x1
jax: 0.10.0
libtpu: 0.0.40
codegen_flags: <defaults>
</compile_context>

<pallas_src>
import functools

import jax
import jax.numpy as jnp
from jax.experimental import pallas as pl
from jax.experimental.pallas import tpu as pltpu


def _vae_encoder_kernel(x_ref, w1_ref, b1_ref, w2_ref, b2_ref, eps_ref, out_ref):
    latent_dim = out_ref.shape[-1]
    lp = w2_ref.shape[-1] // 2          # 128-aligned start of the log_var columns

    # ---- fc1 + ReLU: bf16 MXU operands, f32 accumulate, f32 elementwise ----
    x_bf16 = x_ref[...].astype(jnp.bfloat16)
    h = jnp.dot(x_bf16, w1_ref[...], preferred_element_type=jnp.float32)
    h = jnp.maximum(h + b1_ref[...], 0.0)

    # ---- fused fc2: one matmul -> [tile_b, 2*Lp] = [mean |0| log_var |0] ----
    mv = jnp.dot(h.astype(jnp.bfloat16), w2_ref[...],
                 preferred_element_type=jnp.float32) + b2_ref[...]
    mean = mv[:, :latent_dim]             # starts at lane 0: free view
    log_var = mv[:, lp:lp + latent_dim]   # starts 128-aligned: free view

    # ---- reparameterize: mean + eps * exp(0.5*log_var) (EUP exp, f32) ----
    std = jnp.exp(0.5 * log_var)
    out_ref[...] = (mean + eps_ref[...] * std).astype(out_ref.dtype)


def _round_up(n, m):
    return ((n + m - 1) // m) * m


def _tpu_topology():
    """Best-effort (physical_vmem_bytes, tensorcores_per_chip).
    Conservative fallbacks (64 MiB, 1 TC) if the query API is unavailable."""
    vmem = 64 << 20           # safe for every current generation (v7x = 64 MiB)
    n_tc = 1
    try:
        info = pltpu.get_tpu_info()
        cap = getattr(info, "vmem_capacity_bytes", 0)
        cap = int(cap) if cap else 0
        if cap > 0:
            vmem = cap
        for attr in ("num_tensorcores", "tensorcores_per_chip",
                     "num_cores", "cores_per_chip"):
            c = getattr(info, attr, None)
            if isinstance(c, int) and c > 0:
                n_tc = c
                break
    except Exception:
        pass
    if n_tc == 1:
        try:
            kind = jax.devices()[0].device_kind.lower()
            if any(tag in kind for tag in ("v7", "v5p", "v4")):
                n_tc = 2      # 2 TensorCores per chip (megacore / v7x)
        except Exception:
            pass
    return vmem, n_tc


def _pick_tile_b(B, row_bytes, *, budget_bytes, n_tc, row_multiple, max_tile=8192):
    """Largest batch tile that (a) divides B, (b) is a multiple of row_multiple
    ((8,128) block rule / bf16 packing), (c) keeps the double-buffered x/eps/z
    streams within budget_bytes. On 2-TC chips, prefer the largest tile that
    still yields >= 2*n_tc grid steps (count divisible by n_tc) so the
    'parallel' axis load-balances across TensorCores."""
    candidates = [t for t in range(row_multiple, min(B, max_tile) + 1, row_multiple)
                  if B % t == 0 and 2 * t * row_bytes <= budget_bytes]
    if not candidates:
        return B              # tiny / awkward B: full-array block is always legal
    if n_tc >= 2:
        for t in reversed(candidates):
            steps = B // t
            if steps >= 2 * n_tc and steps % n_tc == 0:
                return t
    return candidates[-1]     # 1 TC: biggest tile minimizes per-step overhead


def vae_encoder_forward(x, params, eps, *, tile_b=None):
    """x: [B, input_dim] (f32 or bf16). params: w1 (in, 2L) bf16, b1 (1, 2L) f32,
    w2 = [Wm |0| Wv |0] (2L, 2*Lp) bf16, b2 likewise (1, 2*Lp) f32 with
    Lp = round_up(L, 128). eps: [B, L] standard-normal noise. Returns z: [B, L]."""
    B, input_dim = x.shape
    w1, b1 = params["w1"], params["b1"]
    w2, b2 = params["w2"], params["b2"]
    two_l = w1.shape[1]
    two_lp = w2.shape[1]
    latent_dim = eps.shape[1]

    # ---- generation-aware VMEM budgeting ----
    vmem_cap, n_tc = _tpu_topology()
    vmem_limit = int(min((vmem_cap * 3) // 4, 100 << 20))   # ~48 MiB v7x / ~96 MiB v5e,v6e
    weight_bytes = (w1.size * w1.dtype.itemsize + b1.size * b1.dtype.itemsize
                    + w2.size * w2.dtype.itemsize + b2.size * b2.dtype.itemsize)
    headroom = 4 << 20                                       # Mosaic internal scratch
    stream_budget = vmem_limit - weight_bytes - headroom     # weights single-buffered
    row_bytes = (x.dtype.itemsize * input_dim                # x row (streamed)
                 + eps.dtype.itemsize * latent_dim           # eps row (streamed)
                 + x.dtype.itemsize * latent_dim)            # z row (streamed)
    row_multiple = 16 if x.dtype == jnp.bfloat16 else 8
    if stream_budget < 2 * row_multiple * row_bytes:
        # Resident W1 no longer fits next to even a minimal batch tile.
        # TODO(synk): add a K-tiled fc1 path (streamed W1, f32 h accumulator in
        # VMEM scratch, fc2+reparameterize under pl.when(k == last)) for very
        # large input_dim instead of raising.
        raise ValueError("input_dim too large for resident-W1 tiling on this chip")

    if tile_b is None:
        tile_b = _pick_tile_b(B, row_bytes, budget_bytes=stream_budget,
                              n_tc=n_tc, row_multiple=row_multiple)
    assert B % tile_b == 0, "tile_b must divide B"
    assert tile_b == B or tile_b % row_multiple == 0, (
        "tile_b must be a multiple of %d ((8,128) block rule / packing)" % row_multiple)
    grid = (B // tile_b,)

    cost = pl.CostEstimate(
        flops=2 * B * (input_dim * two_l + two_l * two_lp),
        transcendentals=B * latent_dim,
        bytes_accessed=(x.size * x.dtype.itemsize
                        + eps.size * eps.dtype.itemsize
                        + B * latent_dim * x.dtype.itemsize
                        + weight_bytes))

    # Constant-index (resident) blocks: single-buffered to halve weight VMEM.
    resident = functools.partial(pl.BlockSpec, pipeline_mode=pl.Buffered(1))

    return pl.pallas_call(
        _vae_encoder_kernel,
        out_shape=jax.ShapeDtypeStruct((B, latent_dim), x.dtype),
        grid_spec=pltpu.PrefetchScalarGridSpec(
            num_scalar_prefetch=0,
            grid=grid,
            in_specs=[
                pl.BlockSpec((tile_b, input_dim), lambda i: (i, 0)),    # x   (streamed)
                resident((input_dim, two_l), lambda i: (0, 0)),         # w1  (resident)
                resident((1, two_l), lambda i: (0, 0)),                 # b1
                resident((two_l, two_lp), lambda i: (0, 0)),            # w2 = [Wm|0|Wv|0]
                resident((1, two_lp), lambda i: (0, 0)),                # b2
                pl.BlockSpec((tile_b, latent_dim), lambda i: (i, 0)),   # eps (streamed)
            ],
            out_specs=pl.BlockSpec((tile_b, latent_dim), lambda i: (i, 0)),
        ),
        compiler_params=pltpu.CompilerParams(
            dimension_semantics=("parallel",),
            vmem_limit_bytes=vmem_limit),
        cost_estimate=cost,
    )(x, w1, b1, w2, b2, eps)


def init_params(key, input_dim, latent_dim):
    """nn.Linear-style init; weights stored (in_features, out_features) in bf16.
    fc2_mean/fc2_log_var are pre-fused into one weight/bias pair whose log_var
    columns start at a 128-lane-aligned offset Lp (zero padding in between)."""
    k1, k2, k3, k4, k5, k6 = jax.random.split(key, 6)
    two_l = 2 * latent_dim
    lp = _round_up(latent_dim, 128)

    def lin(kw, kb, fan_in, fan_out):
        bound = 1.0 / jnp.sqrt(fan_in)
        w = jax.random.uniform(kw, (fan_in, fan_out), jnp.float32, -bound, bound)
        b = jax.random.uniform(kb, (1, fan_out), jnp.float32, -bound, bound)
        return w, b

    w1, b1 = lin(k1, k2, input_dim, two_l)
    wm, bm = lin(k3, k4, two_l, latent_dim)
    wv, bv = lin(k5, k6, two_l, latent_dim)

    w2 = jnp.zeros((two_l, 2 * lp), jnp.float32)
    w2 = w2.at[:, :latent_dim].set(wm).at[:, lp:lp + latent_dim].set(wv)
    b2 = jnp.zeros((1, 2 * lp), jnp.float32)
    b2 = b2.at[:, :latent_dim].set(bm).at[:, lp:lp + latent_dim].set(bv)

    return {"w1": w1.astype(jnp.bfloat16), "b1": b1,
            "w2": w2.astype(jnp.bfloat16), "b2": b2}


def reference_forward(x, params, eps):
    """Plain-JAX reference with the same bf16-operand / f32-accumulate math."""
    latent_dim = eps.shape[1]
    lp = params["w2"].shape[1] // 2
    h = jnp.dot(x.astype(jnp.bfloat16), params["w1"],
                preferred_element_type=jnp.float32) + params["b1"]
    h = jnp.maximum(h, 0.0)
    mv = jnp.dot(h.astype(jnp.bfloat16), params["w2"],
                 preferred_element_type=jnp.float32) + params["b2"]
    mean = mv[:, :latent_dim]
    log_var = mv[:, lp:lp + latent_dim]
    return mean + eps * jnp.exp(0.5 * log_var)


if __name__ == "__main__":
    key = jax.random.PRNGKey(0)
    k_param, k_x, k_eps = jax.random.split(key, 3)

    B, input_dim, latent_dim = 64, 32, 16
    params = init_params(k_param, input_dim, latent_dim)
    x = jax.random.normal(k_x, (B, input_dim), jnp.float32)
    # eps sampled wrapper-side (deterministic) so the kernel matches the
    # reference exactly; torch.randn_like in the module is inherently random.
    eps = jax.random.normal(k_eps, (B, latent_dim), jnp.float32)

    # Explicit 4-step grid (exercises the batch-tiled, double-buffered path)...
    z = jax.block_until_ready(vae_encoder_forward(x, params, eps, tile_b=16))
    # ...and the generation-aware auto tile (biggest tile on 1-TC chips,
    # >= 4 balanced 'parallel' steps on 2-TC chips).
    z_auto = jax.block_until_ready(vae_encoder_forward(x, params, eps))

    z_ref = reference_forward(x, params, eps)
    assert z.shape == (B, latent_dim)
    assert jnp.allclose(z, z_ref, atol=5e-3, rtol=5e-3)
    assert jnp.allclose(z_auto, z_ref, atol=5e-3, rtol=5e-3)
    print("KERNEL_OK")
</pallas_src>

<mosaic_0001>
module attributes {stable_mosaic.version = 11 : i64} {
  func.func @_vae_encoder_kernel(%arg0: i32, %arg1: memref<16x32xf32, #tpu.memory_space<vmem>>, %arg2: memref<32x32xbf16, #tpu.memory_space<vmem>>, %arg3: memref<1x32xf32, #tpu.memory_space<vmem>>, %arg4: memref<32x256xbf16, #tpu.memory_space<vmem>>, %arg5: memref<1x256xf32, #tpu.memory_space<vmem>>, %arg6: memref<16x16xf32, #tpu.memory_space<vmem>>, %arg7: memref<16x16xf32, #tpu.memory_space<vmem>>) attributes {dimension_semantics = [#tpu.dimension_semantics<parallel>], iteration_bounds = array<i64: 4>, scalar_prefetch = 0 : i64, scratch_operands = 0 : i64, tpu.core_type = #tpu.core_type<tc>, window_params = [{transform_indices = @transform_0, window_bounds = array<i64: 16, 32>}, {pipeline_mode = #tpu.pipeline_mode<synchronous>, transform_indices = @transform_1, window_bounds = array<i64: 32, 32>}, {pipeline_mode = #tpu.pipeline_mode<synchronous>, transform_indices = @transform_2, window_bounds = array<i64: 1, 32>}, {pipeline_mode = #tpu.pipeline_mode<synchronous>, transform_indices = @transform_3, window_bounds = array<i64: 32, 256>}, {pipeline_mode = #tpu.pipeline_mode<synchronous>, transform_indices = @transform_4, window_bounds = array<i64: 1, 256>}, {transform_indices = @transform_5, window_bounds = array<i64: 16, 16>}, {transform_indices = @transform_6, window_bounds = array<i64: 16, 16>}]} {
    %c0 = arith.constant 0 : index
    %c0_0 = arith.constant 0 : index
    %0 = vector.load %arg1[%c0, %c0_0] : memref<16x32xf32, #tpu.memory_space<vmem>>, vector<16x32xf32>
    %1 = arith.truncf %0 : vector<16x32xf32> to vector<16x32xbf16>
    %c0_1 = arith.constant 0 : index
    %c0_2 = arith.constant 0 : index
    %2 = vector.load %arg2[%c0_1, %c0_2] : memref<32x32xbf16, #tpu.memory_space<vmem>>, vector<32x32xbf16>
    %cst = arith.constant dense<0.000000e+00> : vector<16x32xf32>
    %3 = tpu.matmul %1, %2, %cst {dimension_numbers = #tpu.dot_dimension_numbers<[1], [0], [0], [1], [0, 0, 1, 1], [], []>} : vector<16x32xbf16>, vector<32x32xbf16>, vector<16x32xf32> -> vector<16x32xf32>
    %c0_3 = arith.constant 0 : index
    %c0_4 = arith.constant 0 : index
    %4 = vector.load %arg3[%c0_3, %c0_4] : memref<1x32xf32, #tpu.memory_space<vmem>>, vector<1x32xf32>
    %5 = vector.broadcast %4 : vector<1x32xf32> to vector<16x32xf32>
    %6 = arith.addf %3, %5 : vector<16x32xf32>
    %cst_5 = arith.constant 0.000000e+00 : f32
    %7 = vector.broadcast %cst_5 : f32 to vector<16x32xf32>
    %8 = arith.maximumf %6, %7 : vector<16x32xf32>
    %9 = arith.truncf %8 : vector<16x32xf32> to vector<16x32xbf16>
    %c0_6 = arith.constant 0 : index
    %c0_7 = arith.constant 0 : index
    %10 = vector.load %arg4[%c0_6, %c0_7] : memref<32x256xbf16, #tpu.memory_space<vmem>>, vector<32x256xbf16>
    %cst_8 = arith.constant dense<0.000000e+00> : vector<16x256xf32>
    %11 = tpu.matmul %9, %10, %cst_8 {dimension_numbers = #tpu.dot_dimension_numbers<[1], [0], [0], [1], [0, 0, 1, 1], [], []>} : vector<16x32xbf16>, vector<32x256xbf16>, vector<16x256xf32> -> vector<16x256xf32>
    %c0_9 = arith.constant 0 : index
    %c0_10 = arith.constant 0 : index
    %12 = vector.load %arg5[%c0_9, %c0_10] : memref<1x256xf32, #tpu.memory_space<vmem>>, vector<1x256xf32>
    %13 = vector.broadcast %12 : vector<1x256xf32> to vector<16x256xf32>
    %14 = arith.addf %11, %13 : vector<16x256xf32>
    %15 = vector.extract_strided_slice %14 {offsets = [0, 0], sizes = [16, 16], strides = [1, 1]} : vector<16x256xf32> to vector<16x16xf32>
    %16 = vector.extract_strided_slice %14 {offsets = [0, 128], sizes = [16, 16], strides = [1, 1]} : vector<16x256xf32> to vector<16x16xf32>
    %cst_11 = arith.constant 5.000000e-01 : f32
    %17 = vector.broadcast %cst_11 : f32 to vector<16x16xf32>
    %18 = arith.mulf %17, %16 : vector<16x16xf32>
    %19 = math.exp %18 : vector<16x16xf32>
    %c0_12 = arith.constant 0 : index
    %c0_13 = arith.constant 0 : index
    %20 = vector.load %arg6[%c0_12, %c0_13] : memref<16x16xf32, #tpu.memory_space<vmem>>, vector<16x16xf32>
    %21 = arith.mulf %20, %19 : vector<16x16xf32>
    %22 = arith.addf %15, %21 : vector<16x16xf32>
    %c0_14 = arith.constant 0 : index
    %c0_15 = arith.constant 0 : index
    %23 = vector.load %arg7[%c0_14, %c0_15] : memref<16x16xf32, #tpu.memory_space<vmem>>, vector<16x16xf32>
    tpu.vector_store %arg7[%c0_14, %c0_15], %22 {strides = array<i32>} : memref<16x16xf32, #tpu.memory_space<vmem>>, vector<16x16xf32>,
    return
  }
  func.func @transform_0(%arg0: i32) -> (i32, i32) {
    %c0_i32 = arith.constant 0 : i32
    %c0_i32_0 = arith.constant 0 : i32
    return %arg0, %c0_i32 : i32, i32
  }
  func.func @transform_1(%arg0: i32) -> (i32, i32) {
    %c0_i32 = arith.constant 0 : i32
    %c0_i32_0 = arith.constant 0 : i32
    %c0_i32_1 = arith.constant 0 : i32
    return %c0_i32, %c0_i32_0 : i32, i32
  }
  func.func @transform_2(%arg0: i32) -> (i32, i32) {
    %c0_i32 = arith.constant 0 : i32
    %c0_i32_0 = arith.constant 0 : i32
    %c0_i32_1 = arith.constant 0 : i32
    return %c0_i32, %c0_i32_0 : i32, i32
  }
  func.func @transform_3(%arg0: i32) -> (i32, i32) {
    %c0_i32 = arith.constant 0 : i32
    %c0_i32_0 = arith.constant 0 : i32
    %c0_i32_1 = arith.constant 0 : i32
    return %c0_i32, %c0_i32_0 : i32, i32
  }
  func.func @transform_4(%arg0: i32) -> (i32, i32) {
    %c0_i32 = arith.constant 0 : i32
    %c0_i32_0 = arith.constant 0 : i32
    %c0_i32_1 = arith.constant 0 : i32
    return %c0_i32, %c0_i32_0 : i32, i32
  }
  func.func @transform_5(%arg0: i32) -> (i32, i32) {
    %c0_i32 = arith.constant 0 : i32
    %c0_i32_0 = arith.constant 0 : i32
    return %arg0, %c0_i32 : i32, i32
  }
  func.func @transform_6(%arg0: i32) -> (i32, i32) {
    %c0_i32 = arith.constant 0 : i32
    %c0_i32_0 = arith.constant 0 : i32
    return %arg0, %c0_i32 : i32, i32
  }
}

</mosaic_0001>

<llo_original>
// kernel: tpu_custom_call.1
$region0: #{tpu_custom_call.1}
  #allocation0 [shape = 'u32[]', space=smem, size = 0x4, offset = 0x4, fixed_abs, tag = 'smem constant byte address 0x4 - core index']
  #allocation1 [shape = 'u32[144,128]{1,0:T(1,128)}', space=vmem, size = 0x12000, scoped, tag = 'internal scratch']
  %s0 = inlined_call_operand.vmem [shape: f32[64,32], index: 0, kind: input, shape index: {}]
  %s1 = inlined_call_operand.vmem [shape: bf16[32,32], index: 1, kind: input, shape index: {}]
  %s2 = inlined_call_operand.vmem [shape: f32[1,32], index: 2, kind: input, shape index: {}]
  %s3 = inlined_call_operand.vmem [shape: bf16[32,256], index: 3, kind: input, shape index: {}]
  %s4 = inlined_call_operand.vmem [shape: f32[1,256], index: 4, kind: input, shape index: {}]
  %s5 = inlined_call_operand.vmem [shape: f32[64,16], index: 5, kind: input, shape index: {}]
  %s6 = inlined_call_operand.vmem [shape: f32[64,16], index: 6, kind: output, shape index: {}]
  %s7 = sld [smem:[#allocation0]]
  $region57: #{tpu_custom_call.1} parent=0
    _
  %s9 = ssub.s32 1, %s7
  %s10 = scalar_select 0, %s9, %s7
  loop: start=0, step=1, limit=6
  $region2: #{tpu_custom_call.1} parent=0 // loop_pre_header
    _
  $region3: #{tpu_custom_call.1} parent=0 // loop_header
    %s12 = sphi 0, %s16
    %p13 = scmp.ge.s32.totalorder %s12, 6
    %s22 = sphi 0, %s24
    %s25 = sphi 0, %s22
    %s26 = sphi 0, %s25
    %s42 = sphi 0, %s26
    %s46 = sphi 0, %s46
    %s48 = sphi 0, %s46
    %s49 = sphi 0, %s48
    %s63 = sphi 0, %s49
    %s67 = sphi 0, %s67
    %s69 = sphi 0, %s67
    %s70 = sphi 0, %s69
    %s84 = sphi 0, %s70
    %s88 = sphi 0, %s88
    %s90 = sphi 0, %s88
    %s91 = sphi 0, %s90
    %s105 = sphi 0, %s91
    %s109 = sphi 0, %s109
    %s111 = sphi 0, %s109
    %s112 = sphi 0, %s111
    %s126 = sphi 0, %s112
    %s132 = sphi 0, %s134
    %s135 = sphi 0, %s132
    %s136 = sphi 0, %s135
    %s152 = sphi 0, %s136
    %s158 = sphi 0, %s160
    %s161 = sphi 0, %s158
    %s162 = sphi 0, %s161
    %s178 = sphi 0, %s162
  $region4: #{tpu_custom_call.1} parent=0 // loop_header_branch
    %15 = sbr.rel (%p13) target = $region8
  $region5: #{tpu_custom_call.1} parent=0 // loop_body
    %s17 = ssub.s32 %s12, 1
    %s18 = ssub.s32 %s12, 2
    %s19 = sadd.s32 %s12, 1
    %s20 = ssub.s32 %s12, %s19
    %p21 = scmp.eq.s32.totalorder %s20, 0
    %s23 = sadd.s32 %s22, 1
    %s24 = scalar_select %p21, %s22, %s23
    %p27 = pneg %p21
    %p28 = scmp.eq.s32.totalorder %s12, 3
    %p29 = por %p27, %p28
    %p30 = scmp.ne.s32.totalorder %s22, %s25
    %p31 = scmp.eq.s32.totalorder %s12, 0
    %p32 = por %p30, %p31
    %p33 = scmp.ne.s32.totalorder %s22, %s25
    %p34 = scmp.eq.s32.totalorder %s17, 3
    %p35 = por %p33, %p34
    %p36 = scmp.ne.s32.totalorder %s25, %s26
    %p37 = scmp.eq.s32.totalorder %s17, 0
    %p38 = por %p36, %p37
    %p39 = scmp.ne.s32.totalorder %s25, %s26
    %p40 = scmp.eq.s32.totalorder %s18, 3
    %p41 = por %p39, %p40
    %p43 = scmp.ne.s32.totalorder %s26, %s42
    %p44 = scmp.eq.s32.totalorder %s18, 0
    %p45 = por %p43, %p44
    %s47 = sadd.s32 %s46, 1
    %p50 = scmp.eq.s32.totalorder %s12, 3
    %p51 = scmp.ne.s32.totalorder %s46, %s48
    %p52 = scmp.eq.s32.totalorder %s12, 0
    %p53 = por %p51, %p52
    %p54 = scmp.ne.s32.totalorder %s46, %s48
    %p55 = scmp.eq.s32.totalorder %s17, 3
    %p56 = por %p54, %p55
    %p57 = scmp.ne.s32.totalorder %s48, %s49
    %p58 = scmp.eq.s32.totalorder %s17, 0
    %p59 = por %p57, %p58
    %p60 = scmp.ne.s32.totalorder %s48, %s49
    %p61 = scmp.eq.s32.totalorder %s18, 3
    %p62 = por %p60, %p61
    %p64 = scmp.ne.s32.totalorder %s49, %s63
    %p65 = scmp.eq.s32.totalorder %s18, 0
    %p66 = por %p64, %p65
    %s68 = sadd.s32 %s67, 1
    %p71 = scmp.eq.s32.totalorder %s12, 3
    %p72 = scmp.ne.s32.totalorder %s67, %s69
    %p73 = scmp.eq.s32.totalorder %s12, 0
    %p74 = por %p72, %p73
    %p75 = scmp.ne.s32.totalorder %s67, %s69
    %p76 = scmp.eq.s32.totalorder %s17, 3
    %p77 = por %p75, %p76
    %p78 = scmp.ne.s32.totalorder %s69, %s70
    %p79 = scmp.eq.s32.totalorder %s17, 0
    %p80 = por %p78, %p79
    %p81 = scmp.ne.s32.totalorder %s69, %s70
    %p82 = scmp.eq.s32.totalorder %s18, 3
    %p83 = por %p81, %p82
    %p85 = scmp.ne.s32.totalorder %s70, %s84
    %p86 = scmp.eq.s32.totalorder %s18, 0
    %p87 = por %p85, %p86
    %s89 = sadd.s32 %s88, 1
    %p92 = scmp.eq.s32.totalorder %s12, 3
    %p93 = scmp.ne.s32.totalorder %s88, %s90
    %p94 = scmp.eq.s32.totalorder %s12, 0
    %p95 = por %p93, %p94
    %p96 = scmp.ne.s32.totalorder %s88, %s90
    %p97 = scmp.eq.s32.totalorder %s17, 3
    %p98 = por %p96, %p97
    %p99 = scmp.ne.s32.totalorder %s90, %s91
    %p100 = scmp.eq.s32.totalorder %s17, 0
    %p101 = por %p99, %p100
    %p102 = scmp.ne.s32.totalorder %s90, %s91
    %p103 = scmp.eq.s32.totalorder %s18, 3
    %p104 = por %p102, %p103
    %p106 = scmp.ne.s32.totalorder %s91, %s105
    %p107 = scmp.eq.s32.totalorder %s18, 0
    %p108 = por %p106, %p107
    %s110 = sadd.s32 %s109, 1
    %p113 = scmp.eq.s32.totalorder %s12, 3
    %p114 = scmp.ne.s32.totalorder %s109, %s111
    %p115 = scmp.eq.s32.totalorder %s12, 0
    %p116 = por %p114, %p115
    %p117 = scmp.ne.s32.totalorder %s109, %s111
    %p118 = scmp.eq.s32.totalorder %s17, 3
    %p119 = por %p117, %p118
    %p120 = scmp.ne.s32.totalorder %s111, %s112
    %p121 = scmp.eq.s32.totalorder %s17, 0
    %p122 = por %p120, %p121
    %p123 = scmp.ne.s32.totalorder %s111, %s112
    %p124 = scmp.eq.s32.totalorder %s18, 3
    %p125 = por %p123, %p124
    %p127 = scmp.ne.s32.totalorder %s112, %s126
    %p128 = scmp.eq.s32.totalorder %s18, 0
    %p129 = por %p127, %p128
    %s130 = ssub.s32 %s12, %s19
    %p131 = scmp.eq.s32.totalorder %s130, 0
    %s133 = sadd.s32 %s132, 1
    %s134 = scalar_select %p131, %s132, %s133
    %p137 = pneg %p131
    %p138 = scmp.eq.s32.totalorder %s12, 3
    %p139 = por %p137, %p138
    %p140 = scmp.ne.s32.totalorder %s132, %s135
    %p141 = scmp.eq.s32.totalorder %s12, 0
    %p142 = por %p140, %p141
    %p143 = scmp.ne.s32.totalorder %s132, %s135
    %p144 = scmp.eq.s32.totalorder %s17, 3
    %p145 = por %p143, %p144
    %p146 = scmp.ne.s32.totalorder %s135, %s136
    %p147 = scmp.eq.s32.totalorder %s17, 0
    %p148 = por %p146, %p147
    %p149 = scmp.ne.s32.totalorder %s135, %s136
    %p150 = scmp.eq.s32.totalorder %s18, 3
    %p151 = por %p149, %p150
    %p153 = scmp.ne.s32.totalorder %s136, %s152
    %p154 = scmp.eq.s32.totalorder %s18, 0
    %p155 = por %p153, %p154
    %s156 = ssub.s32 %s12, %s19
    %p157 = scmp.eq.s32.totalorder %s156, 0
    %s159 = sadd.s32 %s158, 1
    %s160 = scalar_select %p157, %s158, %s159
    %p163 = pneg %p157
    %p164 = scmp.eq.s32.totalorder %s12, 3
    %p165 = por %p163, %p164
    %p166 = scmp.ne.s32.totalorder %s158, %s161
    %p167 = scmp.eq.s32.totalorder %s12, 0
    %p168 = por %p166, %p167
    %p169 = scmp.ne.s32.totalorder %s158, %s161
    %p170 = scmp.eq.s32.totalorder %s17, 3
    %p171 = por %p169, %p170
    %p172 = scmp.ne.s32.totalorder %s161, %s162
    %p173 = scmp.eq.s32.totalorder %s17, 0
    %p174 = por %p172, %p173
    %p175 = scmp.ne.s32.totalorder %s161, %s162
    %p176 = scmp.eq.s32.totalorder %s18, 3
    %p177 = por %p175, %p176
    %p179 = scmp.ne.s32.totalorder %s162, %s178
    %p180 = scmp.eq.s32.totalorder %s18, 0
    %p181 = por %p179, %p180
    %p182 = scmp.le.s32.totalorder 1, %s12
    %p183 = scmp.lt.s32.totalorder %s12, 5
    %p184 = pnand %p182, %p183
    %p185 = pneg %p184
    // Predicated region
    $region9: #{tpu_custom_call.1} parent=5 // pred_check
      _
    $region10: #{tpu_custom_call.1} parent=5 // pred_check_branch
      %187 = sbr.rel (%p184) target = $region12
    $region11: #{tpu_custom_call.1} parent=5 // pred_region
      %s188 = ssub.s32 %s12, 1
      // Predicated region
      $region13: #{tpu_custom_call.1} parent=11 // pred_check
        %p189 = pneg %p59
      $region14: #{tpu_custom_call.1} parent=11 // pred_check_branch
        %191 = sbr.rel (%p189) target = $region16
      $region15: #{tpu_custom_call.1} parent=11 // pred_region
        _
      $region16: #{tpu_custom_call.1} parent=11 // pred_fallthru
        _
      // Predicated region
      $region17: #{tpu_custom_call.1} parent=11 // pred_check
        %p192 = pneg %p80
      $region18: #{tpu_custom_call.1} parent=11 // pred_check_branch
        %194 = sbr.rel (%p192) target = $region20
      $region19: #{tpu_custom_call.1} parent=11 // pred_region
        _
      $region20: #{tpu_custom_call.1} parent=11 // pred_fallthru
        _
      // Predicated region
      $region21: #{tpu_custom_call.1} parent=11 // pred_check
        %p195 = pneg %p101
      $region22: #{tpu_custom_call.1} parent=11 // pred_check_branch
        %197 = sbr.rel (%p195) target = $region24
      $region23: #{tpu_custom_call.1} parent=11 // pred_region
        _
      $region24: #{tpu_custom_call.1} parent=11 // pred_fallthru
        _
      // Predicated region
      $region25: #{tpu_custom_call.1} parent=11 // pred_check
        %p198 = pneg %p122
      $region26: #{tpu_custom_call.1} parent=11 // pred_check_branch
        %200 = sbr.rel (%p198) target = $region28
      $region27: #{tpu_custom_call.1} parent=11 // pred_region
        _
      $region28: #{tpu_custom_call.1} parent=11 // pred_fallthru
        _
    $region12: #{tpu_custom_call.1} parent=5 // pred_fallthru
      _
    %p201 = scmp.lt.s32.totalorder %s12, 4
    // Predicated region
    $region29: #{tpu_custom_call.1} parent=5 // pred_check
      %p202 = pneg %p201
    $region30: #{tpu_custom_call.1} parent=5 // pred_check_branch
      %204 = sbr.rel (%p202) target = $region32
    $region31: #{tpu_custom_call.1} parent=5 // pred_region
      // Predicated region
      $region33: #{tpu_custom_call.1} parent=31 // pred_check
        %p205 = pneg %p32
      $region34: #{tpu_custom_call.1} parent=31 // pred_check_branch
        %207 = sbr.rel (%p205) target = $region36
      $region35: #{tpu_custom_call.1} parent=31 // pred_region
        %s208 = smul.u32 2, %s12
        %p209 = scmp.lt.s32.totalorder %s208, 7
        %s210 = scalar_select %p209, %s208, 7
        %s211 = smul.addr %s210, 8
        %s212 = scalar_lea.vmem %s0, %s211
        %s213 = smul.u32 2, %s12
      $region36: #{tpu_custom_call.1} parent=31 // pred_fallthru
        _
      // Predicated region
      $region37: #{tpu_custom_call.1} parent=31 // pred_check
        %p214 = pneg %p142
      $region38: #{tpu_custom_call.1} parent=31 // pred_check_branch
        %216 = sbr.rel (%p214) target = $region40
      $region39: #{tpu_custom_call.1} parent=31 // pred_region
        %s217 = smul.u32 2, %s12
        %p218 = scmp.lt.s32.totalorder %s217, 7
        %s219 = scalar_select %p218, %s217, 7
        %s220 = smul.addr %s219, 8
        %s221 = scalar_lea.vmem %s5, %s220
        %s222 = smul.u32 2, %s12
      $region40: #{tpu_custom_call.1} parent=31 // pred_fallthru
        _
    $region32: #{tpu_custom_call.1} parent=5 // pred_fallthru
      _
    %p223 = scmp.le.s32.totalorder 1, %s12
    %p224 = scmp.lt.s32.totalorder %s12, 5
    %p225 = pnand %p223, %p224
    %p226 = pneg %p225
    // Predicated region
    $region41: #{tpu_custom_call.1} parent=5 // pred_check
      _
    $region42: #{tpu_custom_call.1} parent=5 // pred_check_branch
      %228 = sbr.rel (%p225) target = $region44
    $region43: #{tpu_custom_call.1} parent=5 // pred_region
      %s229 = ssub.s32 %s12, 1
      %s230 = smul.u32 2, %s17
      %p231 = scmp.lt.s32.totalorder %s230, 7
      %s232 = scalar_select %p231, %s230, 7
      %s233 = smul.addr %s232, 8
      %s234 = scalar_lea.vmem %s0, %s233
      %p235 = pneg %p38
      %p236 = pneg %p35
      %p237 = pneg %p59
      %p238 = pneg %p56
      %p239 = pneg %p80
      %p240 = pneg %p77
      %p241 = pneg %p101
      %p242 = pneg %p98
      %p243 = pneg %p122
      %p244 = pneg %p119
      %s245 = smul.u32 2, %s17
      %p246 = scmp.lt.s32.totalorder %s245, 7
      %s247 = scalar_select %p246, %s245, 7
      %s248 = smul.addr %s247, 8
      %s249 = scalar_lea.vmem %s5, %s248
      %p250 = pneg %p148
      %p251 = pneg %p145
      %p252 = pneg %p174
      %p253 = pneg %p171
      %s254 = smul.u32 2, %s17
      %p255 = scmp.lt.s32.totalorder %s254, 7
      %s256 = scalar_select %p255, %s254, 7
      %s257 = smul.addr %s256, 8
      %s258 = scalar_lea.vmem %s6, %s257
      %s259 = smul.u32 2, %s17
      %p260 = scmp.lt.s32.totalorder %s259, 7
      %s261 = scalar_select %p260, %s259, 7
      %s262 = smul.addr %s261, 8
      %s263 = scalar_lea.vmem %s0, %s262
      %s264 = smul.u32 2, %s17
      %s265 = smul.u32 2, %s17
      %p266 = scmp.lt.s32.totalorder %s265, 7
      %s267 = scalar_select %p266, %s265, 7
      %s268 = smul.addr %s267, 8
      %s269 = scalar_lea.vmem %s5, %s268
      %s270 = smul.u32 2, %s17
      %s271 = smul.u32 2, %s17
      %p272 = scmp.lt.s32.totalorder %s271, 7
      %s273 = scalar_select %p272, %s271, 7
      %s274 = smul.addr %s273, 8
      %s275 = scalar_lea.vmem %s6, %s274
      %s276 = smul.u32 2, %s17
      %v278 = vld [vmem:[%s263] sm:$0xff]
      %v279 = vld [vmem:[%s263 + $0x8] sm:$0xff]
      %v280 = vpack.c.bf16 %v279, %v278
      %v281 = vld [vmem:[%s1] sm:$0xf]
      %v282 = vld [vmem:[%s1 + $0x4] sm:$0xf]
      %v283 = vld [vmem:[%s1 + $0x8] sm:$0xf]
      %v284 = vld [vmem:[%s1 + $0xc] sm:$0xf]
      %v285 = vld [vmem:[%s2] sm:$0x1]
      %v287 = vlaneseq
      %v288 = vshrl.u32 %v287, 7
      %v289 = vsub.s32 0, %v288
      %v290 = vrot.slane %v285, %v289
      %v296 = vunpack.c.l.b16 %v281
      %v297 = vunpack.c.l.b16 %v282
      %v298 = vunpack.c.l.b16 %v283
      %v299 = vunpack.c.l.b16 %v284
      %v300 = vpack.c.b16 %v297, %v296
      %v301 = vpack.c.b16 %v299, %v298
      %vm304 = vcmask 261120
      %v306 = vsel %vm304, %v280, 0
      %308 = vmatprep.subr.bf16.mxu0 0
      %309 = vmatpush1.bf16.msra.mxu0 0
      %310 = vmatprep.subr.bf16.mxu0 0
      %311 = vmatpush1.bf16.msra.mxu0 0
      %312 = vmatprep.subr.bf16.mxu0 0
      %313 = vmatpush1.bf16.msra.mxu0 0
      %314 = vmatprep.subr.bf16.mxu0 0
      %315 = vmatpush1.bf16.msra.mxu0 0
      %316 = vmatprep.subr.bf16.mxu0 0
      %317 = vmatpush1.bf16.msra.mxu0 0
      %318 = vmatprep.subr.bf16.mxu0 0
      %319 = vmatpush1.bf16.msra.mxu0 0
      %320 = vmatprep.subr.bf16.mxu0 0
      %321 = vmatpush1.bf16.msra.mxu0 %v301
      %322 = vmatprep.subr.bf16.mxu0 0
      %323 = vmatpush1.bf16.msra.mxu0 %v300
      %324 = vmatprep.subr.bf16.mxu0 0
      %325 = vmatpush2.bf16.msra.mxu0 0
      %326 = vmatprep.subr.bf16.mxu0 0
      %327 = vmatpush2.bf16.msra.mxu0 0
      %328 = vmatprep.subr.bf16.mxu0 0
      %329 = vmatpush2.bf16.msra.mxu0 0
      %330 = vmatprep.subr.bf16.mxu0 0
      %331 = vmatpush2.bf16.msra.mxu0 0
      %332 = vmatprep.subr.bf16.mxu0 0
      %333 = vmatpush2.bf16.msra.mxu0 0
      %334 = vmatprep.subr.bf16.mxu0 0
      %335 = vmatpush2.bf16.msra.mxu0 0
      %336 = vmatprep.subr.bf16.mxu0 0
      %337 = vmatpush2.bf16.msra.mxu0 0
      %338 = vmatprep.subr.bf16.mxu0 0
      %339 = vmatpush2.bf16.msra.mxu0 0
      %340 = vmatprep.mubr.bf16.mxu0 0
      %341 = vmatmul.mubr.bf16.gmra.mxu0 %v306
      %v342 = vpop.f32.mrf.mxu0
      %v343 = vadd.f32 %v290, %v342
      %v344 = vpop.f32.mrf.mxu0
      %v345 = vpop.f32.mrf.mxu0
      %v346 = vadd.f32 %v290, %v345
      %v347 = vpop.f32.mrf.mxu0
      %348 = vdwg.mxu0
      %v349 = vmax.f32 %v343, 0.0
      %v350 = vmax.f32 %v346, 0.0
      %v351 = vpack.c.bf16 %v350, %v349
      %v352 = vld [vmem:[%s3] sm:$0xff]
      %v353 = vld [vmem:[%s3 + $0x8] sm:$0xff]
      %v354 = vld [vmem:[%s3 + $0x10] sm:$0xff]
      %v355 = vld [vmem:[%s3 + $0x18] sm:$0xff]
      %v356 = vld [vmem:[%s4] sm:$0x3]
      %v358 = vlaneseq
      %v359 = vshrl.u32 %v358, 7
      %v360 = vsub.s32 0, %v359
      %v361 = vrot.slane %v356, %v360
      %v362 = vlaneseq
      %v363 = vshrl.u32 %v362, 7
      %v364 = vsub.s32 1, %v363
      %v365 = vrot.slane %v356, %v364
      %v372 = vunpack.c.l.b16 %v352
      %v373 = vunpack.c.h.b16 %v352
      %v374 = vunpack.c.l.b16 %v353
      %v375 = vunpack.c.h.b16 %v353
      %v376 = vunpack.c.l.b16 %v354
      %v377 = vunpack.c.h.b16 %v354
      %v378 = vunpack.c.l.b16 %v355
      %v379 = vunpack.c.h.b16 %v355
      %v380 = vpack.c.b16 %v374, %v372
      %v381 = vpack.c.b16 %v375, %v373
      %v382 = vpack.c.b16 %v378, %v376
      %v383 = vpack.c.b16 %v379, %v377
      %v389 = vsel %vm304, %v351, 0
      %391 = vmatprep.subr.bf16.mxu0 0
      %392 = vmatpush1.bf16.msra.mxu0 0
      %393 = vmatprep.subr.bf16.mxu0 0
      %394 = vmatpush1.bf16.msra.mxu0 0
      %395 = vmatprep.subr.bf16.mxu0 0
      %396 = vmatpush1.bf16.msra.mxu0 0
      %397 = vmatprep.subr.bf16.mxu0 0
      %398 = vmatpush1.bf16.msra.mxu0 0
      %399 = vmatprep.subr.bf16.mxu0 0
      %400 = vmatpush1.bf16.msra.mxu0 0
      %401 = vmatprep.subr.bf16.mxu0 0
      %402 = vmatpush1.bf16.msra.mxu0 0
      %403 = vmatprep.subr.bf16.mxu0 %v383
      %404 = vmatpush1.bf16.msra.mxu0 %v382
      %405 = vmatprep.subr.bf16.mxu0 %v381
      %406 = vmatpush1.bf16.msra.mxu0 %v380
      %407 = vmatprep.subr.bf16.mxu0 0
      %408 = vmatpush2.bf16.msra.mxu0 0
      %409 = vmatprep.subr.bf16.mxu0 0
      %410 = vmatpush2.bf16.msra.mxu0 0
      %411 = vmatprep.subr.bf16.mxu0 0
      %412 = vmatpush2.bf16.msra.mxu0 0
      %413 = vmatprep.subr.bf16.mxu0 0
      %414 = vmatpush2.bf16.msra.mxu0 0
      %415 = vmatprep.subr.bf16.mxu0 0
      %416 = vmatpush2.bf16.msra.mxu0 0
      %417 = vmatprep.subr.bf16.mxu0 0
      %418 = vmatpush2.bf16.msra.mxu0 0
      %419 = vmatprep.subr.bf16.mxu0 0
      %420 = vmatpush2.bf16.msra.mxu0 0
      %421 = vmatprep.subr.bf16.mxu0 0
      %422 = vmatpush2.bf16.msra.mxu0 0
      %423 = vmatprep.mubr.bf16.mxu0 0
      %424 = vmatmul.mubr.bf16.gmra.mxu0 %v389
      %v425 = vpop.f32.mrf.mxu0
      %v426 = vadd.f32 %v361, %v425
      %v427 = vpop.f32.mrf.mxu0
      %v428 = vadd.f32 %v365, %v427
      %v429 = vpop.f32.mrf.mxu0
      %v430 = vadd.f32 %v361, %v429
      %v431 = vpop.f32.mrf.mxu0
      %v432 = vadd.f32 %v365, %v431
      %433 = vdwg.mxu0
      %v434 = vmul.f32 %v428, 0.5
      %v435 = vmul.f32 %v432, 0.5
      %v436 = vmul.f32 %v434, 1.442695
      %v437 = vpow.pop %v436
      %v438 = vmul.f32 %v435, 1.442695
      %v439 = vpow.pop %v438
      %v440 = vld [vmem:[%s269] sm:$0xff]
      %v441 = vld [vmem:[%s269 + $0x8] sm:$0xff]
      %v442 = vmul.f32 %v440, %v437
      %v443 = vmul.f32 %v441, %v439
      %v444 = vadd.f32 %v426, %v442
      %v445 = vadd.f32 %v430, %v443
      %vm446 = vcmask 130048
      %447 = vst.msk [vmem:[%s275] sm:$0xff] %vm446, %v444
      %448 = vst.msk [vmem:[%s275 + $0x8] sm:$0xff] %vm446, %v445
      %s449 = smul.u32 2, %s17
      %p450 = scmp.lt.s32.totalorder %s449, 7
      %s451 = scalar_select %p450, %s449, 7
      %s452 = smul.addr %s451, 8
      %s453 = scalar_lea.vmem %s6, %s452
      // Predicated region
      $region45: #{tpu_custom_call.1} parent=43 // pred_check
        %p454 = pneg %p171
      $region46: #{tpu_custom_call.1} parent=43 // pred_check_branch
        %456 = sbr.rel (%p454) target = $region48
      $region47: #{tpu_custom_call.1} parent=43 // pred_region
        %s457 = smul.u32 2, %s17
      $region48: #{tpu_custom_call.1} parent=43 // pred_fallthru
        _
    $region44: #{tpu_custom_call.1} parent=5 // pred_fallthru
      _
    %p458 = scmp.le.s32.totalorder 2, %s12
    // Predicated region
    $region49: #{tpu_custom_call.1} parent=5 // pred_check
      %p459 = pneg %p458
    $region50: #{tpu_custom_call.1} parent=5 // pred_check_branch
      %461 = sbr.rel (%p459) target = $region52
    $region51: #{tpu_custom_call.1} parent=5 // pred_region
      %s462 = ssub.s32 %s12, 2
      // Predicated region
      $region53: #{tpu_custom_call.1} parent=51 // pred_check
        %p463 = pneg %p177
      $region54: #{tpu_custom_call.1} parent=51 // pred_check_branch
        %465 = sbr.rel (%p463) target = $region56
      $region55: #{tpu_custom_call.1} parent=51 // pred_region
        %s466 = smul.u32 2, %s18
        %p467 = scmp.lt.s32.totalorder %s466, 7
        %s468 = scalar_select %p467, %s466, 7
        %s469 = smul.addr %s468, 8
        %s470 = scalar_lea.vmem %s6, %s469
      $region56: #{tpu_custom_call.1} parent=51 // pred_fallthru
        _
    $region52: #{tpu_custom_call.1} parent=5 // pred_fallthru
      _
  $region6: #{tpu_custom_call.1} parent=0 // loop_footer
    %s16 = sadd.s32 1, %s12
  $region7: #{tpu_custom_call.1} parent=0 // loop_footer_branch
    %11 = sbr.rel target = $region3
  $region8: #{tpu_custom_call.1} parent=0 // loop_exit
    _

</llo_original>
